<compile_context>
chip_gen: v5e
topology: v5e:2x2
jax: 0.10.0
libtpu: 0.0.40
codegen_flags: <defaults>
</compile_context>

<pallas_src>
import jax
import jax.numpy as jnp
from jax.experimental import pallas as pl
from jax.experimental.pallas import tpu as pltpu


# ----------------------------- Pallas kernels ------------------------------ #

def _fc1_bias_gelu_kernel(x_ref, w_ref, b_ref, o_ref, acc_ref):
    """h -> 4h tiled matmul with fused bias + tanh-GELU epilogue at last K."""
    k = pl.program_id(2)

    @pl.when(k == 0)
    def _():
        acc_ref[...] = jnp.zeros_like(acc_ref)

    acc_ref[...] += jnp.dot(x_ref[...], w_ref[...],
                            preferred_element_type=jnp.float32)

    @pl.when(k == pl.num_programs(2) - 1)
    def _():
        # Megatron bias_gelu_impl (tanh approximation), computed in f32.
        x = acc_ref[...] + b_ref[...]
        y = x * 0.5 * (1.0 + jnp.tanh(0.79788456 * x * (1.0 + 0.044715 * x * x)))
        o_ref[...] = y.astype(o_ref.dtype)


def _matmul_kernel(x_ref, w_ref, o_ref, acc_ref):
    """Plain tiled matmul (skip_bias_add: fc2 bias is returned, not added)."""
    k = pl.program_id(2)

    @pl.when(k == 0)
    def _():
        acc_ref[...] = jnp.zeros_like(acc_ref)

    acc_ref[...] += jnp.dot(x_ref[...], w_ref[...],
                            preferred_element_type=jnp.float32)

    @pl.when(k == pl.num_programs(2) - 1)
    def _():
        o_ref[...] = acc_ref[...].astype(o_ref.dtype)


# ------------------------- Generation-aware tiling -------------------------- #

def _chip_config():
    """Tile caps / alignment / VMEM budget per TPU generation."""
    kind = jax.devices()[0].device_kind.lower()
    if ("v5 lite" in kind) or ("v5lite" in kind) or ("v5e" in kind):
        # v5e: ridge ~197TF/0.82TB/s ~ 240 flop/B -> 512x512 output tiles are
        # already at the roofline; 128 MiB physical VMEM (16 MiB scoped default).
        return dict(tm=512, tn=512, tk=1024, align=128, vmem_cap=96 << 20)
    if "v6" in kind:
        # v6e: ridge ~918TF/1.35TB/s ~ 680 flop/B -> 1024-class output tiles.
        return dict(tm=1024, tn=1024, tk=1024, align=256, vmem_cap=96 << 20)
    if ("v7" in kind) or ("tpu7" in kind):
        # v7x: ridge ~310 flop/B but only 64 MiB physical VMEM per core; 1024
        # tiles (~20 MiB working set) clear the ridge inside a 48 MiB cap.
        return dict(tm=1024, tn=1024, tk=1024, align=256, vmem_cap=48 << 20)
    # v4 / v5p / unknown: conservative defaults.
    return dict(tm=512, tn=512, tk=1024, align=128, vmem_cap=64 << 20)


def _pick_tile(dim, max_tile, align):
    """Return (tile, padded_dim).

    Small dims use a full-extent block (no (8,128) constraint).  Large dims get
    the largest align-multiple tile <= max_tile dividing round_up(dim, align);
    the wrapper zero-pads to padded_dim (matmul-neutral) and slices afterwards.
    """
    if dim <= max_tile:
        return dim, dim
    dim_p = -(-dim // align) * align
    t = (max_tile // align) * align
    while t > align and dim_p % t:
        t -= align
    return t, dim_p  # t == align always divides dim_p, so t is valid.


# ------------------------------ Matmul wrapper ------------------------------ #

def _tiled_matmul(x, w, bias=None, *, out_dtype, fuse_bias_gelu=False, cfg=None):
    """out = x @ w (optionally with fused bias + tanh-GELU epilogue).

    x and w must already be bf16 (convert weights ONCE via prepare_params);
    a per-call cast here would re-stream the full f32 weights through HBM on
    every forward, which dominates runtime at GPT-3 scale.
    """
    if cfg is None:
        cfg = _chip_config()
    assert x.dtype == jnp.bfloat16 and w.dtype == jnp.bfloat16

    M, K = x.shape
    Kw, N = w.shape
    assert K == Kw

    # 16-aligned M tiles (bf16 sublane packing); 128/256-aligned N/K tiles keep
    # the MXU fed; tk stays large so the per-K accumulator RMW never saturates
    # the vst slot (v5e has a single vst slot).
    tm, Mp = _pick_tile(M, cfg["tm"], 16)
    tn, Np = _pick_tile(N, cfg["tn"], cfg["align"])
    tk, Kp = _pick_tile(K, cfg["tk"], cfg["align"])

    if (Mp, Kp) != (M, K):
        x = jnp.pad(x, ((0, Mp - M), (0, Kp - K)))
    if (Kp, Np) != (K, N):
        w = jnp.pad(w, ((0, Kp - K), (0, Np - N)))

    grid = (Mp // tm, Np // tn, Kp // tk)

    x_spec = pl.BlockSpec((tm, tk), lambda i, j, k: (i, k))
    w_spec = pl.BlockSpec((tk, tn), lambda i, j, k: (k, j))
    o_spec = pl.BlockSpec((tm, tn), lambda i, j, k: (i, j))

    out_bytes = jnp.dtype(out_dtype).itemsize

    # Honest streaming estimate: x re-read once per N tile, w once per M tile.
    cost = pl.CostEstimate(
        flops=2 * Mp * Np * Kp,
        transcendentals=(Mp * Np) if fuse_bias_gelu else 0,
        bytes_accessed=(Np // tn) * Mp * Kp * 2
        + (Mp // tm) * Kp * Np * 2
        + Mp * Np * out_bytes,
    )

    # Double-buffered bf16 inputs + double-buffered output + resident f32
    # accumulator, with headroom, clamped to the generation's VMEM budget.
    need = (2 * (tm * tk + tk * tn) * 2 + 2 * tm * tn * out_bytes
            + tm * tn * 4 + 8 * tn)
    vmem_limit = int(min(cfg["vmem_cap"],
                         max(32 << 20, int(need * 1.5) + (2 << 20))))

    if fuse_bias_gelu:
        assert bias is not None
        if bias.shape[1] != Np:
            bias = jnp.pad(bias, ((0, 0), (0, Np - bias.shape[1])))
        in_specs = [x_spec, w_spec, pl.BlockSpec((1, tn), lambda i, j, k: (0, j))]
        kernel = _fc1_bias_gelu_kernel
        args = (x, w, bias)
    else:
        in_specs = [x_spec, w_spec]
        kernel = _matmul_kernel
        args = (x, w)

    out = pl.pallas_call(
        kernel,
        out_shape=jax.ShapeDtypeStruct((Mp, Np), out_dtype),
        grid_spec=pltpu.PrefetchScalarGridSpec(
            num_scalar_prefetch=0,
            grid=grid,
            in_specs=in_specs,
            out_specs=o_spec,
            scratch_shapes=[pltpu.VMEM((tm, tn), jnp.float32)],
        ),
        # M/N parallel (megacore-shardable on v7x; at GPT-3 widths N/tn >= 2
        # even when tm == M), K reduction arbitrary (output-resident acc).
        compiler_params=pltpu.CompilerParams(
            dimension_semantics=("parallel", "parallel", "arbitrary"),
            vmem_limit_bytes=vmem_limit),
        cost_estimate=cost,
    )(*args)

    if (Mp, Np) != (M, N):
        out = out[:M, :N]
    return out


# ------------------------------ MLP forward --------------------------------- #

def prepare_params(params):
    """One-time parameter conversion (call ONCE at load time, not per forward):
    weights -> bf16 (half the weight HBM traffic, native MXU feed), fc1 bias ->
    f32 row vector (consumed by the f32 GELU epilogue), fc2 bias unchanged
    (returned un-added, per skip_bias_add)."""
    return {
        "fc1_w": params["fc1_w"].astype(jnp.bfloat16),
        "fc1_b": params["fc1_b"].astype(jnp.float32).reshape(1, -1),
        "fc2_w": params["fc2_w"].astype(jnp.bfloat16),
        "fc2_b": params["fc2_b"],
    }


def gpt3_parallel_mlp(hidden_states, params, *, out_dtype=None):
    """GPT3ParallelMLP.forward.

    hidden_states: [s, b, h].  Returns (output [s, b, h], output_bias [h]);
    the fc2 bias is returned un-added (skip_bias_add=True), as in the module.
    `params` must come from prepare_params (bf16 weights).
    """
    s, b, h = hidden_states.shape
    if out_dtype is None:
        out_dtype = hidden_states.dtype
    cfg = _chip_config()

    x2d = hidden_states.reshape(s * b, h)
    # MXU feed is bf16; pass bf16 hidden_states to skip even this small cast.
    if x2d.dtype != jnp.bfloat16:
        x2d = x2d.astype(jnp.bfloat16)

    # dense_h_to_4h (ColumnParallel, skip_bias_add) with fused bias+tanh-GELU;
    # the [M, 4h] intermediate is written exactly once, in bf16.
    h4 = _tiled_matmul(x2d, params["fc1_w"], params["fc1_b"],
                       out_dtype=jnp.bfloat16, fuse_bias_gelu=True, cfg=cfg)

    # dense_4h_to_h (RowParallel, skip_bias_add): bias returned separately.
    out = _tiled_matmul(h4, params["fc2_w"], out_dtype=out_dtype, cfg=cfg)

    # TODO(synk): tensor-model-parallel all-reduce of the RowParallelLinear
    # output across model ranks is not modeled (single-partition math).
    # TODO(synk): a fully fused fc1+fc2 kernel (resident (tm, h) f32
    # accumulator) would skip the [M, 4h] HBM round trip, but at GPT-3 widths
    # (h=12288) the resident accumulator forces tm small enough to fall below
    # the HBM ridge, so the two-kernel form with 1024-class tiles is kept.

    return out.reshape(s, b, h), params["fc2_b"].reshape(-1)


# --------------------------------- Main ------------------------------------ #

if __name__ == "__main__":
    S, B, H = 8, 2, 32
    FFN = 4 * H

    key = jax.random.PRNGKey(0)
    ks = jax.random.split(key, 5)
    init = lambda k, shape: (0.02 * jax.random.normal(k, shape)).astype(jnp.float32)

    raw_params = {
        "fc1_w": init(ks[0], (H, FFN)),
        "fc1_b": init(ks[1], (FFN,)),
        "fc2_w": init(ks[2], (FFN, H)),
        "fc2_b": init(ks[3], (H,)),
    }
    params = prepare_params(raw_params)          # one-time bf16 conversion
    hidden_states = jax.random.normal(ks[4], (S, B, H), jnp.float32)

    fwd = jax.jit(gpt3_parallel_mlp)
    out, out_bias = fwd(hidden_states, params)
    out = jax.block_until_ready(out)

    # Pure-JAX f32 reference using the bf16-rounded weights (the MXU feed).
    x2d = hidden_states.reshape(S * B, H)
    w1 = params["fc1_w"].astype(jnp.float32)
    b1 = params["fc1_b"].astype(jnp.float32)
    w2 = params["fc2_w"].astype(jnp.float32)
    t = x2d @ w1 + b1
    t = t * 0.5 * (1.0 + jnp.tanh(0.79788456 * t * (1.0 + 0.044715 * t * t)))
    ref = (t @ w2).reshape(S, B, H)

    assert out.shape == (S, B, H)
    assert out_bias.shape == (H,)
    assert bool(jnp.all(jnp.isfinite(out)))
    out_f32 = out.astype(jnp.float32)
    err = float(jnp.max(jnp.abs(out_f32 - ref)))
    assert bool(jnp.allclose(out_f32, ref, rtol=2e-2, atol=2e-2)), err
    print("KERNEL_OK")
</pallas_src>

<mosaic_0001>
module attributes {stable_mosaic.version = 11 : i64} {
  func.func @_matmul_kernel(%arg0: i32, %arg1: i32, %arg2: i32, %arg3: memref<16x128xbf16, #tpu.memory_space<vmem>>, %arg4: memref<128x32xbf16, #tpu.memory_space<vmem>>, %arg5: memref<16x32xf32, #tpu.memory_space<vmem>>, %arg6: memref<16x32xf32, #tpu.memory_space<vmem>>) attributes {dimension_semantics = [#tpu.dimension_semantics<parallel>, #tpu.dimension_semantics<parallel>, #tpu.dimension_semantics<arbitrary>], iteration_bounds = array<i64: 1, 1, 1>, scalar_prefetch = 0 : i64, scratch_operands = 1 : i64, tpu.core_type = #tpu.core_type<tc>, window_params = [{transform_indices = @transform_0, window_bounds = array<i64: 16, 128>}, {transform_indices = @transform_1, window_bounds = array<i64: 128, 32>}, {transform_indices = @transform_2, window_bounds = array<i64: 16, 32>}]} {
    %c0_i32 = arith.constant 0 : i32
    %0 = arith.cmpi eq, %arg2, %c0_i32 : i32
    %1 = arith.extui %0 : i1 to i32
    %c0_i32_0 = arith.constant 0 : i32
    %2 = arith.cmpi ne, %1, %c0_i32_0 : i32
    scf.if %2 {
      %cst_10 = arith.constant 0.000000e+00 : f32
      %12 = vector.broadcast %cst_10 : f32 to vector<16x32xf32>
      %c0_11 = arith.constant 0 : index
      %c0_12 = arith.constant 0 : index
      %13 = vector.load %arg6[%c0_11, %c0_12] : memref<16x32xf32, #tpu.memory_space<vmem>>, vector<16x32xf32>
      tpu.vector_store %arg6[%c0_11, %c0_12], %12 {strides = array<i32>} : memref<16x32xf32, #tpu.memory_space<vmem>>, vector<16x32xf32>,
    } else {
    }
    %c0 = arith.constant 0 : index
    %c0_1 = arith.constant 0 : index
    %3 = vector.load %arg6[%c0, %c0_1] : memref<16x32xf32, #tpu.memory_space<vmem>>, vector<16x32xf32>
    %c0_2 = arith.constant 0 : index
    %c0_3 = arith.constant 0 : index
    %4 = vector.load %arg3[%c0_2, %c0_3] : memref<16x128xbf16, #tpu.memory_space<vmem>>, vector<16x128xbf16>
    %c0_4 = arith.constant 0 : index
    %c0_5 = arith.constant 0 : index
    %5 = vector.load %arg4[%c0_4, %c0_5] : memref<128x32xbf16, #tpu.memory_space<vmem>>, vector<128x32xbf16>
    %cst = arith.constant dense<0.000000e+00> : vector<16x32xf32>
    %6 = tpu.matmul %4, %5, %cst {dimension_numbers = #tpu.dot_dimension_numbers<[1], [0], [0], [1], [0, 0, 1, 1], [], []>} : vector<16x128xbf16>, vector<128x32xbf16>, vector<16x32xf32> -> vector<16x32xf32>
    %7 = arith.addf %3, %6 : vector<16x32xf32>
    %c0_6 = arith.constant 0 : index
    %c0_7 = arith.constant 0 : index
    %8 = vector.load %arg6[%c0_6, %c0_7] : memref<16x32xf32, #tpu.memory_space<vmem>>, vector<16x32xf32>
    tpu.vector_store %arg6[%c0_6, %c0_7], %7 {strides = array<i32>} : memref<16x32xf32, #tpu.memory_space<vmem>>, vector<16x32xf32>,
    %c0_i32_8 = arith.constant 0 : i32
    %9 = arith.cmpi eq, %arg2, %c0_i32_8 : i32
    %10 = arith.extui %9 : i1 to i32
    %c0_i32_9 = arith.constant 0 : i32
    %11 = arith.cmpi ne, %10, %c0_i32_9 : i32
    scf.if %11 {
      %c0_10 = arith.constant 0 : index
      %c0_11 = arith.constant 0 : index
      %12 = vector.load %arg6[%c0_10, %c0_11] : memref<16x32xf32, #tpu.memory_space<vmem>>, vector<16x32xf32>
      %c0_12 = arith.constant 0 : index
      %c0_13 = arith.constant 0 : index
      %13 = vector.load %arg5[%c0_12, %c0_13] : memref<16x32xf32, #tpu.memory_space<vmem>>, vector<16x32xf32>
      tpu.vector_store %arg5[%c0_12, %c0_13], %12 {strides = array<i32>} : memref<16x32xf32, #tpu.memory_space<vmem>>, vector<16x32xf32>,
    } else {
    }
    return
  }
  func.func @transform_0(%arg0: i32, %arg1: i32, %arg2: i32) -> (i32, i32) {
    %c0_i32 = arith.constant 0 : i32
    return %arg0, %arg2 : i32, i32
  }
  func.func @transform_1(%arg0: i32, %arg1: i32, %arg2: i32) -> (i32, i32) {
    %c0_i32 = arith.constant 0 : i32
    return %arg2, %arg1 : i32, i32
  }
  func.func @transform_2(%arg0: i32, %arg1: i32, %arg2: i32) -> (i32, i32) {
    %c0_i32 = arith.constant 0 : i32
    return %arg0, %arg1 : i32, i32
  }
}

module attributes {stable_mosaic.version = 11 : i64} {
  func.func @_fc1_bias_gelu_kernel(%arg0: i32, %arg1: i32, %arg2: i32, %arg3: memref<16x32xbf16, #tpu.memory_space<vmem>>, %arg4: memref<32x128xbf16, #tpu.memory_space<vmem>>, %arg5: memref<1x128xf32, #tpu.memory_space<vmem>>, %arg6: memref<16x128xbf16, #tpu.memory_space<vmem>>, %arg7: memref<16x128xf32, #tpu.memory_space<vmem>>) attributes {dimension_semantics = [#tpu.dimension_semantics<parallel>, #tpu.dimension_semantics<parallel>, #tpu.dimension_semantics<arbitrary>], iteration_bounds = array<i64: 1, 1, 1>, scalar_prefetch = 0 : i64, scratch_operands = 1 : i64, tpu.core_type = #tpu.core_type<tc>, window_params = [{transform_indices = @transform_0, window_bounds = array<i64: 16, 32>}, {transform_indices = @transform_1, window_bounds = array<i64: 32, 128>}, {transform_indices = @transform_2, window_bounds = array<i64: 1, 128>}, {transform_indices = @transform_3, window_bounds = array<i64: 16, 128>}]} {
    %c0_i32 = arith.constant 0 : i32
    %0 = arith.cmpi eq, %arg2, %c0_i32 : i32
    %1 = arith.extui %0 : i1 to i32
    %c0_i32_0 = arith.constant 0 : i32
    %2 = arith.cmpi ne, %1, %c0_i32_0 : i32
    scf.if %2 {
      %cst_10 = arith.constant 0.000000e+00 : f32
      %12 = vector.broadcast %cst_10 : f32 to vector<16x128xf32>
      %c0_11 = arith.constant 0 : index
      %c0_12 = arith.constant 0 : index
      %13 = vector.load %arg7[%c0_11, %c0_12] : memref<16x128xf32, #tpu.memory_space<vmem>>, vector<16x128xf32>
      tpu.vector_store %arg7[%c0_11, %c0_12], %12 {strides = array<i32>} : memref<16x128xf32, #tpu.memory_space<vmem>>, vector<16x128xf32>,
    } else {
    }
    %c0 = arith.constant 0 : index
    %c0_1 = arith.constant 0 : index
    %3 = vector.load %arg7[%c0, %c0_1] : memref<16x128xf32, #tpu.memory_space<vmem>>, vector<16x128xf32>
    %c0_2 = arith.constant 0 : index
    %c0_3 = arith.constant 0 : index
    %4 = vector.load %arg3[%c0_2, %c0_3] : memref<16x32xbf16, #tpu.memory_space<vmem>>, vector<16x32xbf16>
    %c0_4 = arith.constant 0 : index
    %c0_5 = arith.constant 0 : index
    %5 = vector.load %arg4[%c0_4, %c0_5] : memref<32x128xbf16, #tpu.memory_space<vmem>>, vector<32x128xbf16>
    %cst = arith.constant dense<0.000000e+00> : vector<16x128xf32>
    %6 = tpu.matmul %4, %5, %cst {dimension_numbers = #tpu.dot_dimension_numbers<[1], [0], [0], [1], [0, 0, 1, 1], [], []>} : vector<16x32xbf16>, vector<32x128xbf16>, vector<16x128xf32> -> vector<16x128xf32>
    %7 = arith.addf %3, %6 : vector<16x128xf32>
    %c0_6 = arith.constant 0 : index
    %c0_7 = arith.constant 0 : index
    %8 = vector.load %arg7[%c0_6, %c0_7] : memref<16x128xf32, #tpu.memory_space<vmem>>, vector<16x128xf32>
    tpu.vector_store %arg7[%c0_6, %c0_7], %7 {strides = array<i32>} : memref<16x128xf32, #tpu.memory_space<vmem>>, vector<16x128xf32>,
    %c0_i32_8 = arith.constant 0 : i32
    %9 = arith.cmpi eq, %arg2, %c0_i32_8 : i32
    %10 = arith.extui %9 : i1 to i32
    %c0_i32_9 = arith.constant 0 : i32
    %11 = arith.cmpi ne, %10, %c0_i32_9 : i32
    scf.if %11 {
      %c0_10 = arith.constant 0 : index
      %c0_11 = arith.constant 0 : index
      %12 = vector.load %arg7[%c0_10, %c0_11] : memref<16x128xf32, #tpu.memory_space<vmem>>, vector<16x128xf32>
      %c0_12 = arith.constant 0 : index
      %c0_13 = arith.constant 0 : index
      %13 = vector.load %arg5[%c0_12, %c0_13] : memref<1x128xf32, #tpu.memory_space<vmem>>, vector<1x128xf32>
      %14 = vector.broadcast %13 : vector<1x128xf32> to vector<16x128xf32>
      %15 = arith.addf %12, %14 : vector<16x128xf32>
      %cst_14 = arith.constant 5.000000e-01 : f32
      %16 = vector.broadcast %cst_14 : f32 to vector<16x128xf32>
      %17 = arith.mulf %15, %16 : vector<16x128xf32>
      %cst_15 = arith.constant 0.797884583 : f32
      %18 = vector.broadcast %cst_15 : f32 to vector<16x128xf32>
      %19 = arith.mulf %18, %15 : vector<16x128xf32>
      %cst_16 = arith.constant 4.471500e-02 : f32
      %20 = vector.broadcast %cst_16 : f32 to vector<16x128xf32>
      %21 = arith.mulf %20, %15 : vector<16x128xf32>
      %22 = arith.mulf %21, %15 : vector<16x128xf32>
      %cst_17 = arith.constant 1.000000e+00 : f32
      %23 = vector.broadcast %cst_17 : f32 to vector<16x128xf32>
      %24 = arith.addf %23, %22 : vector<16x128xf32>
      %25 = arith.mulf %19, %24 : vector<16x128xf32>
      %26 = math.tanh %25 : vector<16x128xf32>
      %cst_18 = arith.constant 1.000000e+00 : f32
      %27 = vector.broadcast %cst_18 : f32 to vector<16x128xf32>
      %28 = arith.addf %27, %26 : vector<16x128xf32>
      %29 = arith.mulf %17, %28 : vector<16x128xf32>
      %30 = arith.truncf %29 : vector<16x128xf32> to vector<16x128xbf16>
      %c0_19 = arith.constant 0 : index
      %c0_20 = arith.constant 0 : index
      %31 = vector.load %arg6[%c0_19, %c0_20] : memref<16x128xbf16, #tpu.memory_space<vmem>>, vector<16x128xbf16>
      tpu.vector_store %arg6[%c0_19, %c0_20], %30 {strides = array<i32>} : memref<16x128xbf16, #tpu.memory_space<vmem>>, vector<16x128xbf16>,
    } else {
    }
    return
  }
  func.func @transform_0(%arg0: i32, %arg1: i32, %arg2: i32) -> (i32, i32) {
    %c0_i32 = arith.constant 0 : i32
    return %arg0, %arg2 : i32, i32
  }
  func.func @transform_1(%arg0: i32, %arg1: i32, %arg2: i32) -> (i32, i32) {
    %c0_i32 = arith.constant 0 : i32
    return %arg2, %arg1 : i32, i32
  }
  func.func @transform_2(%arg0: i32, %arg1: i32, %arg2: i32) -> (i32, i32) {
    %c0_i32 = arith.constant 0 : i32
    %c0_i32_0 = arith.constant 0 : i32
    return %c0_i32, %arg1 : i32, i32
  }
  func.func @transform_3(%arg0: i32, %arg1: i32, %arg2: i32) -> (i32, i32) {
    %c0_i32 = arith.constant 0 : i32
    return %arg0, %arg1 : i32, i32
  }
}

</mosaic_0001>

<llo_original>
// kernel: gpt3_parallel_mlp.3
$region0: #{gpt3_parallel_mlp.3}
  #allocation0 [shape = 'u32[]', space=smem, size = 0x4, offset = 0x4, fixed_abs, tag = 'smem constant byte address 0x4 - core index']
  #allocation1 [shape = 'u32[72,128]{1,0:T(1,128)}', space=vmem, size = 0x9000, scoped, tag = 'internal scratch']
  #allocation2 [shape = 'f32[16,32]{1,0:T(8,128)}', space=vmem, size = 0x2000, scoped, tag = 'scratch operand']
  %s0 = inlined_call_operand.vmem [shape: bf16[16,128], index: 0, kind: input, shape index: {}]
  %s1 = inlined_call_operand.vmem [shape: bf16[128,32], index: 1, kind: input, shape index: {}]
  %s2 = inlined_call_operand.hbm [shape: f32[16,32], index: 2, kind: output, shape index: {}]
  %s3 = sld [smem:[#allocation0]]
  $region26: #{gpt3_parallel_mlp.3} parent=0
    _
  %s5 = ssub.s32 1, %s3
  %s6 = scalar_select 0, %s5, %s3
  $region1: #{gpt3_parallel_mlp.3} parent=0
    #allocation3 [shape = 'u8[8192]{0}', space=vmem, size = 0x2000, scoped, tag = 'output window, operand 0, single buffered']
    #allocation4 [shape = 's32[1]{0}', space=sflag, size = 0x4, scoped, tag = 'scoped memory for gpt3_parallel_mlp.3']
    %7 = vsyncpa [#allocation4], 0
    // Predicated region
    $region2: #{gpt3_parallel_mlp.3} parent=1 // pred_check
      _
    $region3: #{gpt3_parallel_mlp.3} parent=1 // pred_check_branch
      %9 = sbr.rel (0) target = $region5
    $region4: #{gpt3_parallel_mlp.3} parent=1 // pred_region
      _
    $region5: #{gpt3_parallel_mlp.3} parent=1 // pred_fallthru
      _
    // Predicated region
    $region6: #{gpt3_parallel_mlp.3} parent=1 // pred_check
      _
    $region7: #{gpt3_parallel_mlp.3} parent=1 // pred_check_branch
      %11 = sbr.rel (0) target = $region9
    $region8: #{gpt3_parallel_mlp.3} parent=1 // pred_region
      _
    $region9: #{gpt3_parallel_mlp.3} parent=1 // pred_fallthru
      _
    %p12 = scmp.eq.s32.totalorder 0, 0
    // Predicated region
    $region10: #{gpt3_parallel_mlp.3} parent=1 // pred_check
      %p13 = pneg %p12
    $region11: #{gpt3_parallel_mlp.3} parent=1 // pred_check_branch
      %15 = sbr.rel (%p13) target = $region13
    $region12: #{gpt3_parallel_mlp.3} parent=1 // pred_region
      %vm16 = vcmask 261120
      %17 = vst.msk [vmem:[#allocation2] sm:$0xff] %vm16, 0.0
      %18 = vst.msk [vmem:[#allocation2 + $0x8] sm:$0xff] %vm16, 0.0
    $region13: #{gpt3_parallel_mlp.3} parent=1 // pred_fallthru
      _
    %v19 = vld [vmem:[#allocation2] sm:$0xff]
    %v20 = vld [vmem:[#allocation2 + $0x8] sm:$0xff]
    %v21 = vld [vmem:[%s0] sm:$0xf]
    %v22 = vld [vmem:[%s0 + $0x4] sm:$0xf]
    %v23 = vld [vmem:[%s1] sm:$0xf]
    %v24 = vld [vmem:[%s1 + $0x4] sm:$0xf]
    %v25 = vld [vmem:[%s1 + $0x8] sm:$0xf]
    %v26 = vld [vmem:[%s1 + $0xc] sm:$0xf]
    %v27 = vld [vmem:[%s1 + $0x10] sm:$0xf]
    %v28 = vld [vmem:[%s1 + $0x14] sm:$0xf]
    %v29 = vld [vmem:[%s1 + $0x18] sm:$0xf]
    %v30 = vld [vmem:[%s1 + $0x1c] sm:$0xf]
    %v31 = vld [vmem:[%s1 + $0x20] sm:$0xf]
    %v32 = vld [vmem:[%s1 + $0x24] sm:$0xf]
    %v33 = vld [vmem:[%s1 + $0x28] sm:$0xf]
    %v34 = vld [vmem:[%s1 + $0x2c] sm:$0xf]
    %v35 = vld [vmem:[%s1 + $0x30] sm:$0xf]
    %v36 = vld [vmem:[%s1 + $0x34] sm:$0xf]
    %v37 = vld [vmem:[%s1 + $0x38] sm:$0xf]
    %v38 = vld [vmem:[%s1 + $0x3c] sm:$0xf]
    %v41 = vunpack.c.l.b16 %v21
    %v42 = vunpack.c.l.b16 %v22
    %v43 = vpack.c.b16 %v42, %v41
    %v61 = vunpack.c.l.b16 %v23
    %v62 = vunpack.c.l.b16 %v24
    %v63 = vunpack.c.l.b16 %v25
    %v64 = vunpack.c.l.b16 %v26
    %v65 = vunpack.c.l.b16 %v27
    %v66 = vunpack.c.l.b16 %v28
    %v67 = vunpack.c.l.b16 %v29
    %v68 = vunpack.c.l.b16 %v30
    %v69 = vunpack.c.l.b16 %v31
    %v70 = vunpack.c.l.b16 %v32
    %v71 = vunpack.c.l.b16 %v33
    %v72 = vunpack.c.l.b16 %v34
    %v73 = vunpack.c.l.b16 %v35
    %v74 = vunpack.c.l.b16 %v36
    %v75 = vunpack.c.l.b16 %v37
    %v76 = vunpack.c.l.b16 %v38
    %v77 = vpack.c.b16 %v62, %v61
    %v78 = vpack.c.b16 %v64, %v63
    %v79 = vpack.c.b16 %v66, %v65
    %v80 = vpack.c.b16 %v68, %v67
    %v81 = vpack.c.b16 %v70, %v69
    %v82 = vpack.c.b16 %v72, %v71
    %v83 = vpack.c.b16 %v74, %v73
    %v84 = vpack.c.b16 %v76, %v75
    %93 = vmatpush.bf16.msra.mxu0 %v84
    %94 = vmatpush.bf16.msra.mxu0 %v83
    %95 = vmatpush.bf16.msra.mxu0 %v82
    %96 = vmatpush.bf16.msra.mxu0 %v81
    %97 = vmatpush.bf16.msra.mxu0 %v80
    %98 = vmatpush.bf16.msra.mxu0 %v79
    %99 = vmatpush.bf16.msra.mxu0 %v78
    %100 = vmatpush.bf16.msra.mxu0 %v77
    %101 = vmatmul.bf16.gmra.mxu0 %v43
    %v102 = vpop.f32.mrf.mxu0
    %v103 = vadd.f32 0.0, %v102
    %v104 = vpop.f32.mrf.mxu0
    %v105 = vadd.f32 0.0, %v104
    %106 = vdwg.mxu0
    %v107 = vadd.f32 %v19, %v103
    %v108 = vadd.f32 %v20, %v105
    %vm109 = vcmask 261120
    %110 = vst.msk [vmem:[#allocation2] sm:$0xff] %vm109, %v107
    %111 = vst.msk [vmem:[#allocation2 + $0x8] sm:$0xff] %vm109, %v108
    // Predicated region
    $region14: #{gpt3_parallel_mlp.3} parent=1 // pred_check
      %p112 = pneg %p12
    $region15: #{gpt3_parallel_mlp.3} parent=1 // pred_check_branch
      %114 = sbr.rel (%p112) target = $region17
    $region16: #{gpt3_parallel_mlp.3} parent=1 // pred_region
      %v115 = vld [vmem:[#allocation2] sm:$0xff]
      %v116 = vld [vmem:[#allocation2 + $0x8] sm:$0xff]
      %117 = vst.msk [vmem:[#allocation3] sm:$0xff] %vm109, %v115
      %118 = vst.msk [vmem:[#allocation3 + $0x8] sm:$0xff] %vm109, %v116
    $region17: #{gpt3_parallel_mlp.3} parent=1 // pred_fallthru
      _
    // Predicated region
    $region18: #{gpt3_parallel_mlp.3} parent=1 // pred_check
      _
    $region19: #{gpt3_parallel_mlp.3} parent=1 // pred_check_branch
      %120 = sbr.rel (0) target = $region21
    $region20: #{gpt3_parallel_mlp.3} parent=1 // pred_region
      %122 = vsyncadd [#allocation4], 0
      %s123 = sshll.u32 [#allocation3], 4
      %s124 = int_to_ptr.vmem [resolvable:$true] %s123
      %s125 = sshll.u32 %s2, 4
      %s126 = int_to_ptr.hbm [resolvable:$true] %s125
      %131 = dma.vmem_to_hbm [thread:$0]  %s124, 256, %s126, [#allocation4], 128, 128, 8
    $region21: #{gpt3_parallel_mlp.3} parent=1 // pred_fallthru
      _
    // Predicated region
    $region22: #{gpt3_parallel_mlp.3} parent=1 // pred_check
      _
    $region23: #{gpt3_parallel_mlp.3} parent=1 // pred_check_branch
      %133 = sbr.rel (0) target = $region25
    $region24: #{gpt3_parallel_mlp.3} parent=1 // pred_region
      %135 = dma.done [#allocation4], 256
    $region25: #{gpt3_parallel_mlp.3} parent=1 // pred_fallthru
      _
    %136 = vsyncpa [#allocation4], 1

// kernel: gpt3_parallel_mlp.2
$region0: #{gpt3_parallel_mlp.2}
  #allocation0 [shape = 'u32[]', space=smem, size = 0x4, offset = 0x4, fixed_abs, tag = 'smem constant byte address 0x4 - core index']
  #allocation1 [shape = 'u32[72,128]{1,0:T(1,128)}', space=vmem, size = 0x9000, scoped, tag = 'internal scratch']
  #allocation2 [shape = 'f32[16,128]{1,0:T(8,128)}', space=vmem, size = 0x2000, scoped, tag = 'scratch operand']
  %s0 = inlined_call_operand.vmem [shape: bf16[16,32], index: 0, kind: input, shape index: {}]
  %s1 = inlined_call_operand.vmem [shape: bf16[32,128], index: 1, kind: input, shape index: {}]
  %s2 = inlined_call_operand.vmem [shape: f32[1,128], index: 2, kind: input, shape index: {}]
  %s3 = inlined_call_operand.vmem [shape: bf16[16,128], index: 3, kind: output, shape index: {}]
  %s4 = sld [smem:[#allocation0]]
  $region30: #{gpt3_parallel_mlp.2} parent=0
    _
  %s6 = ssub.s32 1, %s4
  %s7 = scalar_select 0, %s6, %s4
  // Predicated region
  $region2: #{gpt3_parallel_mlp.2} parent=0 // pred_check
    _
  $region3: #{gpt3_parallel_mlp.2} parent=0 // pred_check_branch
    %9 = sbr.rel (0) target = $region5
  $region4: #{gpt3_parallel_mlp.2} parent=0 // pred_region
    _
  $region5: #{gpt3_parallel_mlp.2} parent=0 // pred_fallthru
    _
  // Predicated region
  $region6: #{gpt3_parallel_mlp.2} parent=0 // pred_check
    _
  $region7: #{gpt3_parallel_mlp.2} parent=0 // pred_check_branch
    %11 = sbr.rel (0) target = $region9
  $region8: #{gpt3_parallel_mlp.2} parent=0 // pred_region
    _
  $region9: #{gpt3_parallel_mlp.2} parent=0 // pred_fallthru
    _
  // Predicated region
  $region10: #{gpt3_parallel_mlp.2} parent=0 // pred_check
    _
  $region11: #{gpt3_parallel_mlp.2} parent=0 // pred_check_branch
    %13 = sbr.rel (0) target = $region13
  $region12: #{gpt3_parallel_mlp.2} parent=0 // pred_region
    _
  $region13: #{gpt3_parallel_mlp.2} parent=0 // pred_fallthru
    _
  %p15 = scmp.eq.s32.totalorder 0, 0
  // Predicated region
  $region14: #{gpt3_parallel_mlp.2} parent=0 // pred_check
    %p16 = pneg %p15
  $region15: #{gpt3_parallel_mlp.2} parent=0 // pred_check_branch
    %18 = sbr.rel (%p16) target = $region17
  $region16: #{gpt3_parallel_mlp.2} parent=0 // pred_region
    %19 = vst [vmem:[#allocation2] sm:$0xff] 0.0
    %20 = vst [vmem:[#allocation2 + $0x8] sm:$0xff] 0.0
  $region17: #{gpt3_parallel_mlp.2} parent=0 // pred_fallthru
    _
  %v21 = vld [vmem:[#allocation2] sm:$0xff]
  %v22 = vld [vmem:[#allocation2 + $0x8] sm:$0xff]
  %v23 = vld [vmem:[%s0] sm:$0xf]
  %v24 = vld [vmem:[%s0 + $0x4] sm:$0xf]
  %v25 = vld [vmem:[%s1] sm:$0xf]
  %v26 = vld [vmem:[%s1 + $0x4] sm:$0xf]
  %v27 = vld [vmem:[%s1 + $0x8] sm:$0xf]
  %v28 = vld [vmem:[%s1 + $0xc] sm:$0xf]
  %v31 = vunpack.c.l.b16 %v23
  %v32 = vunpack.c.l.b16 %v24
  %v33 = vpack.c.b16 %v32, %v31
  %v38 = vunpack.c.l.b16 %v25
  %v39 = vunpack.c.l.b16 %v26
  %v40 = vunpack.c.l.b16 %v27
  %v41 = vunpack.c.l.b16 %v28
  %v42 = vpack.c.b16 %v39, %v38
  %v43 = vpack.c.b16 %v41, %v40
  %vm46 = vcmask 261120
  %v48 = vsel %vm46, %v33, 0
  %50 = vmatpush.bf16.msra.mxu0 0
  %51 = vmatpush.bf16.msra.mxu0 0
  %52 = vmatpush.bf16.msra.mxu0 0
  %53 = vmatpush.bf16.msra.mxu0 0
  %54 = vmatpush.bf16.msra.mxu0 0
  %55 = vmatpush.bf16.msra.mxu0 0
  %56 = vmatpush.bf16.msra.mxu0 %v43
  %57 = vmatpush.bf16.msra.mxu0 %v42
  %58 = vmatmul.bf16.gmra.mxu0 %v48
  %v59 = vpop.f32.mrf.mxu0
  %v60 = vadd.f32 0.0, %v59
  %v61 = vpop.f32.mrf.mxu0
  %v62 = vadd.f32 0.0, %v61
  %63 = vdwg.mxu0
  %v64 = vadd.f32 %v21, %v60
  %v65 = vadd.f32 %v22, %v62
  %66 = vst [vmem:[#allocation2] sm:$0xff] %v64
  %67 = vst [vmem:[#allocation2 + $0x8] sm:$0xff] %v65
  // Predicated region
  $region18: #{gpt3_parallel_mlp.2} parent=0 // pred_check
    %p68 = pneg %p15
  $region19: #{gpt3_parallel_mlp.2} parent=0 // pred_check_branch
    %70 = sbr.rel (%p68) target = $region21
  $region20: #{gpt3_parallel_mlp.2} parent=0 // pred_region
    %v71 = vld [vmem:[#allocation2] sm:$0xff]
    %v72 = vld [vmem:[#allocation2 + $0x8] sm:$0xff]
    %v73 = vld [vmem:[%s2] sm:$0x1]
    %v75 = vperm.slane %v73, 0
    %v77 = vadd.f32 %v71, %v75
    %v78 = vadd.f32 %v72, %v75
    %v79 = vmul.f32 %v77, 0.5
    %v80 = vmul.f32 %v78, 0.5
    %v81 = vmul.f32 %v77, 0.7978846
    %v82 = vmul.f32 %v78, 0.7978846
    %v83 = vmul.f32 %v77, 0.044715
    %v84 = vmul.f32 %v78, 0.044715
    %v85 = vmul.f32 %v83, %v77
    %v86 = vmul.f32 %v84, %v78
    %v87 = vadd.f32 %v85, 1.0
    %v88 = vadd.f32 %v86, 1.0
    %v89 = vmul.f32 %v81, %v87
    %v90 = vmul.f32 %v82, %v88
    %v91 = vtanh.pop %v89
    %v92 = vtanh.pop %v90
    %v93 = vadd.f32 %v91, 1.0
    %v94 = vadd.f32 %v92, 1.0
    %v95 = vmul.f32 %v79, %v93
    %v96 = vmul.f32 %v80, %v94
    %v97 = vpack.c.bf16 %v95, %v95
    %v98 = vpack.c.bf16 %v96, %v96
    %99 = vst [vmem:[%s3] sm:$0xf] %v97
    %100 = vst [vmem:[%s3 + $0x4] sm:$0xf] %v98
  $region21: #{gpt3_parallel_mlp.2} parent=0 // pred_fallthru
    _
  // Predicated region
  $region22: #{gpt3_parallel_mlp.2} parent=0 // pred_check
    _
  $region23: #{gpt3_parallel_mlp.2} parent=0 // pred_check_branch
    %102 = sbr.rel (0) target = $region25
  $region24: #{gpt3_parallel_mlp.2} parent=0 // pred_region
    _
  $region25: #{gpt3_parallel_mlp.2} parent=0 // pred_fallthru
    _
  // Predicated region
  $region26: #{gpt3_parallel_mlp.2} parent=0 // pred_check
    _
  $region27: #{gpt3_parallel_mlp.2} parent=0 // pred_check_branch
    %104 = sbr.rel (0) target = $region29
  $region28: #{gpt3_parallel_mlp.2} parent=0 // pred_region
    _
  $region29: #{gpt3_parallel_mlp.2} parent=0 // pred_fallthru
    _

</llo_original>
